<compile_context>
chip_gen: v5e
topology: v5e:2x2
jax: 0.10.0
libtpu: 0.0.40
codegen_flags: <defaults>
</compile_context>

<pallas_src>
import functools

import jax
import jax.numpy as jnp
from jax.experimental import pallas as pl
from jax.experimental.pallas import tpu as pltpu


def _round_up(x, m):
    return ((x + m - 1) // m) * m


# ---------------- kernels ----------------

def _ws_linear_kernel(x_ref, w_ref, b_ref, o_ref, acc_ref, *, scale):
    """Multi-K-step path: f32 VMEM accumulator, K is the last grid axis."""
    k = pl.program_id(2)

    @pl.when(k == 0)
    def _():
        acc_ref[...] = jnp.zeros_like(acc_ref)

    # x tile: (tm, tk); w tile (pre-transposed): (tk, tn) -> plain MXU matmul.
    acc_ref[...] += jnp.dot(x_ref[...], w_ref[...],
                            preferred_element_type=jnp.float32)

    @pl.when(k == pl.num_programs(2) - 1)
    def _():
        # Epilogue: scale + bias applied once per (tm, tn) output tile, in f32.
        o_ref[...] = (acc_ref[...] * scale + b_ref[...]).astype(o_ref.dtype)


def _ws_linear_kernel_1k(x_ref, w_ref, b_ref, o_ref, *, scale):
    """Single-K-step fast path: no scratch accumulator, no branching."""
    acc = jnp.dot(x_ref[...], w_ref[...], preferred_element_type=jnp.float32)
    o_ref[...] = (acc * scale + b_ref[...]).astype(o_ref.dtype)


# ---------------- wrapper ----------------

def ws_linear(x, weight, bias, gain=2, *,
              tm_target=512, tn_target=1024, tk_target=512,
              single_k_max=2048,
              compute_dtype=jnp.bfloat16,
              vmem_budget_bytes=24 * 1024 * 1024):
    """y = (x * sqrt(gain/in_features)) @ weight.T + bias.

    x: (..., in_features); weight: (out, in); bias: (out,) -> (..., out).
    compute_dtype: MXU operand dtype (default bf16; accumulation is always f32).
    Pass compute_dtype=None to keep x's dtype on the MXU.
    """
    orig_shape = x.shape
    K = orig_shape[-1]
    N, Kw = weight.shape
    assert Kw == K, "weight must be (out_features, in_features)"
    out_dtype = x.dtype
    scale = float((gain / K) ** 0.5)

    # Flatten any leading dims into one big M (amortizes MXU weight pushes).
    x2 = x.reshape(-1, K)
    B = x2.shape[0]

    if compute_dtype is None:
        compute_dtype = x2.dtype
    xc = x2.astype(compute_dtype)
    # One-time transpose to (K, N): contraction on sublanes, N on lanes.
    wc = weight.astype(compute_dtype).T

    c_item = jnp.dtype(compute_dtype).itemsize
    o_item = jnp.dtype(out_dtype).itemsize
    sub = max(8, 32 // c_item)          # sublane rows per vreg: f32 8, bf16 16, int8/fp8 32

    # ---- tile sizes (clipped to padded problem dims, layout aligned) ----
    tm = min(_round_up(tm_target, sub), _round_up(B, sub))
    tn = min(_round_up(tn_target, 128), _round_up(N, 128))
    K_pad128 = _round_up(K, 128)
    if K_pad128 <= single_k_max:
        tk = K_pad128                    # whole K in one step: drop the K grid axis
    else:
        tk = min(_round_up(tk_target, 128), K_pad128)

    # ---- VMEM budget: 2x-buffered x/W/bias/out tiles + f32 acc scratch ----
    def _footprint(tm_, tn_, tk_):
        multi_k = (_round_up(K, tk_) // tk_) > 1
        fp = 2 * tm_ * tk_ * c_item      # x tiles (double-buffered)
        fp += 2 * tk_ * tn_ * c_item     # W tiles (double-buffered)
        fp += 2 * tn_ * 4                # bias tiles
        fp += 2 * tm_ * tn_ * o_item     # output tiles (double-buffered)
        if multi_k:
            fp += tm_ * tn_ * 4          # f32 accumulator scratch
        return fp

    while _footprint(tm, tn, tk) > vmem_budget_bytes and tn > 128:
        tn = max(128, (tn // 2) // 128 * 128)
    while _footprint(tm, tn, tk) > vmem_budget_bytes and tm > sub:
        tm = max(sub, (tm // 2) // sub * sub)
    while _footprint(tm, tn, tk) > vmem_budget_bytes and tk > 128:
        tk = max(128, (tk // 2) // 128 * 128)

    M_pad = _round_up(B, tm)
    N_pad = _round_up(N, tn)
    K_pad = _round_up(K, tk)

    # ---- zero-pad to tile multiples (zeros in K contribute nothing) ----
    if (M_pad, K_pad) != (B, K):
        xc = jnp.pad(xc, ((0, M_pad - B), (0, K_pad - K)))
    if (K_pad, N_pad) != (K, N):
        wc = jnp.pad(wc, ((0, K_pad - K), (0, N_pad - N)))
    bp = bias.astype(jnp.float32)
    if N_pad != N:
        bp = jnp.pad(bp, (0, N_pad - N))
    bp = bp.reshape(1, N_pad)

    gm, gn, gk = M_pad // tm, N_pad // tn, K_pad // tk
    m_leading = gm >= gn                 # keep the bigger parallel extent leading (v7x megacore)

    if gk == 1:
        kernel = functools.partial(_ws_linear_kernel_1k, scale=scale)
        scratch = []
        dims = ("parallel", "parallel")
        if m_leading:
            grid = (gm, gn)
            x_map = lambda i, j: (i, 0)
            w_map = lambda i, j: (0, j)
            b_map = lambda i, j: (0, j)
            o_map = lambda i, j: (i, j)
        else:
            grid = (gn, gm)
            x_map = lambda j, i: (i, 0)
            w_map = lambda j, i: (0, j)
            b_map = lambda j, i: (0, j)
            o_map = lambda j, i: (i, j)
    else:
        kernel = functools.partial(_ws_linear_kernel, scale=scale)
        scratch = [pltpu.VMEM((tm, tn), jnp.float32)]
        dims = ("parallel", "parallel", "arbitrary")
        if m_leading:
            grid = (gm, gn, gk)
            x_map = lambda i, j, k: (i, k)
            w_map = lambda i, j, k: (k, j)
            b_map = lambda i, j, k: (0, j)
            o_map = lambda i, j, k: (i, j)
        else:
            grid = (gn, gm, gk)
            x_map = lambda j, i, k: (i, k)
            w_map = lambda j, i, k: (k, j)
            b_map = lambda j, i, k: (0, j)
            o_map = lambda j, i, k: (i, j)

    # Bytes include re-streaming: W is streamed once per M block row, x once per
    # N block column; output is written back once per (i, j) tile.
    cost = pl.CostEstimate(
        flops=2 * M_pad * K_pad * N_pad,
        transcendentals=0,
        bytes_accessed=int(xc.size * c_item * gn
                           + wc.size * c_item * gm
                           + bp.size * 4 * gm * gk
                           + M_pad * N_pad * o_item),
    )

    out_padded = pl.pallas_call(
        kernel,
        out_shape=jax.ShapeDtypeStruct((M_pad, N_pad), out_dtype),
        grid_spec=pltpu.PrefetchScalarGridSpec(
            num_scalar_prefetch=0,
            grid=grid,
            in_specs=[
                pl.BlockSpec((tm, tk), x_map),    # x        (M_pad, K_pad)
                pl.BlockSpec((tk, tn), w_map),    # weight.T (K_pad, N_pad)
                pl.BlockSpec((1, tn), b_map),     # bias     (1, N_pad) f32
            ],
            out_specs=pl.BlockSpec((tm, tn), o_map),
            scratch_shapes=scratch,
        ),
        compiler_params=pltpu.CompilerParams(dimension_semantics=dims),
        cost_estimate=cost,
    )(xc, wc, bp)

    out = out_padded[:B, :N]
    return out.reshape(orig_shape[:-1] + (N,))


if __name__ == "__main__":
    key = jax.random.PRNGKey(0)
    k_x, k_w = jax.random.split(key)

    batch, in_features, out_features, gain = 8, 32, 64, 2

    x = jax.random.normal(k_x, (batch, in_features), dtype=jnp.float32)
    # nn.init.normal_(weight): standard normal; bias zeroed.
    weight = jax.random.normal(k_w, (out_features, in_features), dtype=jnp.float32)
    bias = jnp.zeros((out_features,), dtype=jnp.float32)

    out = ws_linear(x, weight, bias, gain=gain)
    out = jax.block_until_ready(out)

    # Reference check (plain JAX, f32). The kernel default is a bf16 MXU path
    # with f32 accumulation, so tolerance is loosened accordingly.
    scale = (gain / in_features) ** 0.5
    ref = (x * scale) @ weight.T + bias
    assert out.shape == (batch, out_features)
    assert jnp.allclose(out, ref, atol=5e-2, rtol=5e-2)

    # Also sanity-check the exact f32 MXU path.
    out_f32 = jax.block_until_ready(ws_linear(x, weight, bias, gain=gain,
                                              compute_dtype=None))
    assert jnp.allclose(out_f32, ref, atol=1e-5, rtol=1e-5)

    print("KERNEL_OK")
</pallas_src>

<mosaic_0001>
module attributes {stable_mosaic.version = 11 : i64} {
  func.func @_ws_linear_kernel_1k(%arg0: i32, %arg1: i32, %arg2: memref<16x128xbf16, #tpu.memory_space<vmem>>, %arg3: memref<128x128xbf16, #tpu.memory_space<vmem>>, %arg4: memref<1x128xf32, #tpu.memory_space<vmem>>, %arg5: memref<16x128xf32, #tpu.memory_space<vmem>>) attributes {dimension_semantics = [#tpu.dimension_semantics<parallel>, #tpu.dimension_semantics<parallel>], iteration_bounds = array<i64: 1, 1>, scalar_prefetch = 0 : i64, scratch_operands = 0 : i64, tpu.core_type = #tpu.core_type<tc>, window_params = [{transform_indices = @transform_0, window_bounds = array<i64: 16, 128>}, {transform_indices = @transform_1, window_bounds = array<i64: 128, 128>}, {transform_indices = @transform_2, window_bounds = array<i64: 1, 128>}, {transform_indices = @transform_3, window_bounds = array<i64: 16, 128>}]} {
    %c0 = arith.constant 0 : index
    %c0_0 = arith.constant 0 : index
    %0 = vector.load %arg2[%c0, %c0_0] : memref<16x128xbf16, #tpu.memory_space<vmem>>, vector<16x128xbf16>
    %c0_1 = arith.constant 0 : index
    %c0_2 = arith.constant 0 : index
    %1 = vector.load %arg3[%c0_1, %c0_2] : memref<128x128xbf16, #tpu.memory_space<vmem>>, vector<128x128xbf16>
    %cst = arith.constant dense<0.000000e+00> : vector<16x128xf32>
    %2 = tpu.matmul %0, %1, %cst {dimension_numbers = #tpu.dot_dimension_numbers<[1], [0], [0], [1], [0, 0, 1, 1], [], []>} : vector<16x128xbf16>, vector<128x128xbf16>, vector<16x128xf32> -> vector<16x128xf32>
    %cst_3 = arith.constant 2.500000e-01 : f32
    %3 = vector.broadcast %cst_3 : f32 to vector<16x128xf32>
    %4 = arith.mulf %2, %3 : vector<16x128xf32>
    %c0_4 = arith.constant 0 : index
    %c0_5 = arith.constant 0 : index
    %5 = vector.load %arg4[%c0_4, %c0_5] : memref<1x128xf32, #tpu.memory_space<vmem>>, vector<1x128xf32>
    %6 = vector.broadcast %5 : vector<1x128xf32> to vector<16x128xf32>
    %7 = arith.addf %4, %6 : vector<16x128xf32>
    %c0_6 = arith.constant 0 : index
    %c0_7 = arith.constant 0 : index
    %8 = vector.load %arg5[%c0_6, %c0_7] : memref<16x128xf32, #tpu.memory_space<vmem>>, vector<16x128xf32>
    tpu.vector_store %arg5[%c0_6, %c0_7], %7 {strides = array<i32>} : memref<16x128xf32, #tpu.memory_space<vmem>>, vector<16x128xf32>,
    return
  }
  func.func @transform_0(%arg0: i32, %arg1: i32) -> (i32, i32) {
    %c0_i32 = arith.constant 0 : i32
    %c0_i32_0 = arith.constant 0 : i32
    return %arg0, %c0_i32 : i32, i32
  }
  func.func @transform_1(%arg0: i32, %arg1: i32) -> (i32, i32) {
    %c0_i32 = arith.constant 0 : i32
    %c0_i32_0 = arith.constant 0 : i32
    return %c0_i32, %arg1 : i32, i32
  }
  func.func @transform_2(%arg0: i32, %arg1: i32) -> (i32, i32) {
    %c0_i32 = arith.constant 0 : i32
    %c0_i32_0 = arith.constant 0 : i32
    return %c0_i32, %arg1 : i32, i32
  }
  func.func @transform_3(%arg0: i32, %arg1: i32) -> (i32, i32) {
    %c0_i32 = arith.constant 0 : i32
    return %arg0, %arg1 : i32, i32
  }
}

</mosaic_0001>

<llo_original>
// kernel: tpu_custom_call.1
$region0: #{tpu_custom_call.1}
  #allocation0 [shape = 'u32[]', space=smem, size = 0x4, offset = 0x4, fixed_abs, tag = 'smem constant byte address 0x4 - core index']
  #allocation1 [shape = 'u32[72,128]{1,0:T(1,128)}', space=vmem, size = 0x9000, scoped, tag = 'internal scratch']
  %s0 = inlined_call_operand.hbm [shape: bf16[16,128], index: 0, kind: input, shape index: {}]
  %s1 = inlined_call_operand.hbm [shape: bf16[128,128], index: 1, kind: input, shape index: {}]
  %s2 = inlined_call_operand.vmem [shape: f32[1,128], index: 2, kind: input, shape index: {}]
  %s3 = inlined_call_operand.hbm [shape: f32[16,128], index: 3, kind: output, shape index: {}]
  %s4 = sld [smem:[#allocation0]]
  $region30: #{tpu_custom_call.1} parent=0
    _
  %s6 = ssub.s32 1, %s4
  %s7 = scalar_select 0, %s6, %s4
  $region1: #{tpu_custom_call.1} parent=0
    #allocation2 [shape = 'u8[4096]{0}', space=vmem, size = 0x1000, scoped, tag = 'input window, operand 0, single buffered']
    #allocation3 [shape = 's32[1]{0}', space=sflag, size = 0x4, scoped, tag = 'scoped memory for tpu_custom_call.1']
    #allocation4 [shape = 's32[1]{0}', space=sflag, size = 0x4, scoped, tag = 'scoped memory for tpu_custom_call.1']
    #allocation5 [shape = 'u8[32768]{0}', space=vmem, size = 0x8000, scoped, tag = 'input window, operand 1, single buffered']
    #allocation6 [shape = 's32[1]{0}', space=sflag, size = 0x4, scoped, tag = 'scoped memory for tpu_custom_call.1']
    #allocation7 [shape = 'u8[8192]{0}', space=vmem, size = 0x2000, scoped, tag = 'output window, operand 0, single buffered']
    %8 = vsyncpa [#allocation3], 0
    %9 = vsyncpa [#allocation6], 0
    %10 = vsyncpa [#allocation4], 0
    // Predicated region
    $region2: #{tpu_custom_call.1} parent=1 // pred_check
      _
    $region3: #{tpu_custom_call.1} parent=1 // pred_check_branch
      %12 = sbr.rel (0) target = $region5
    $region4: #{tpu_custom_call.1} parent=1 // pred_region
      %14 = vsyncadd [#allocation3], 0
      %s15 = sshll.u32 %s0, 4
      %s16 = int_to_ptr.hbm [resolvable:$true] %s15
      %s17 = sshll.u32 [#allocation2], 4
      %s18 = int_to_ptr.vmem [resolvable:$true] %s17
      %23 = dma.hbm_to_vmem [thread:$0]  %s16, 128, %s18, [#allocation3], 64, 64, 4
    $region5: #{tpu_custom_call.1} parent=1 // pred_fallthru
      _
    // Predicated region
    $region6: #{tpu_custom_call.1} parent=1 // pred_check
      _
    $region7: #{tpu_custom_call.1} parent=1 // pred_check_branch
      %25 = sbr.rel (0) target = $region9
    $region8: #{tpu_custom_call.1} parent=1 // pred_region
      %27 = vsyncadd [#allocation6], 0
      %s28 = sshll.u32 %s1, 4
      %s29 = int_to_ptr.hbm [resolvable:$true] %s28
      %s30 = sshll.u32 [#allocation5], 4
      %s31 = int_to_ptr.vmem [resolvable:$true] %s30
      %36 = dma.hbm_to_vmem [thread:$0]  %s29, 1024, %s31, [#allocation6], 64, 64, 4
    $region9: #{tpu_custom_call.1} parent=1 // pred_fallthru
      _
    // Predicated region
    $region10: #{tpu_custom_call.1} parent=1 // pred_check
      _
    $region11: #{tpu_custom_call.1} parent=1 // pred_check_branch
      %38 = sbr.rel (0) target = $region13
    $region12: #{tpu_custom_call.1} parent=1 // pred_region
      _
    $region13: #{tpu_custom_call.1} parent=1 // pred_fallthru
      _
    // Predicated region
    $region14: #{tpu_custom_call.1} parent=1 // pred_check
      _
    $region15: #{tpu_custom_call.1} parent=1 // pred_check_branch
      %40 = sbr.rel (0) target = $region17
    $region16: #{tpu_custom_call.1} parent=1 // pred_region
      %42 = dma.done [#allocation3], 128
    $region17: #{tpu_custom_call.1} parent=1 // pred_fallthru
      _
    // Predicated region
    $region18: #{tpu_custom_call.1} parent=1 // pred_check
      _
    $region19: #{tpu_custom_call.1} parent=1 // pred_check_branch
      %44 = sbr.rel (0) target = $region21
    $region20: #{tpu_custom_call.1} parent=1 // pred_region
      %46 = dma.done [#allocation6], 1024
    $region21: #{tpu_custom_call.1} parent=1 // pred_fallthru
      _
    %v47 = vld [vmem:[#allocation2] sm:$0xf]
    %v48 = vld [vmem:[#allocation2 + $0x4] sm:$0xf]
    %v49 = vld [vmem:[#allocation5] sm:$0xf]
    %v50 = vld [vmem:[#allocation5 + $0x4] sm:$0xf]
    %v51 = vld [vmem:[#allocation5 + $0x8] sm:$0xf]
    %v52 = vld [vmem:[#allocation5 + $0xc] sm:$0xf]
    %v53 = vld [vmem:[#allocation5 + $0x10] sm:$0xf]
    %v54 = vld [vmem:[#allocation5 + $0x14] sm:$0xf]
    %v55 = vld [vmem:[#allocation5 + $0x18] sm:$0xf]
    %v56 = vld [vmem:[#allocation5 + $0x1c] sm:$0xf]
    %v57 = vld [vmem:[#allocation5 + $0x20] sm:$0xf]
    %v58 = vld [vmem:[#allocation5 + $0x24] sm:$0xf]
    %v59 = vld [vmem:[#allocation5 + $0x28] sm:$0xf]
    %v60 = vld [vmem:[#allocation5 + $0x2c] sm:$0xf]
    %v61 = vld [vmem:[#allocation5 + $0x30] sm:$0xf]
    %v62 = vld [vmem:[#allocation5 + $0x34] sm:$0xf]
    %v63 = vld [vmem:[#allocation5 + $0x38] sm:$0xf]
    %v64 = vld [vmem:[#allocation5 + $0x3c] sm:$0xf]
    %v67 = vunpack.c.l.b16 %v47
    %v68 = vunpack.c.l.b16 %v48
    %v69 = vpack.c.b16 %v68, %v67
    %v87 = vunpack.c.l.b16 %v49
    %v88 = vunpack.c.l.b16 %v50
    %v89 = vunpack.c.l.b16 %v51
    %v90 = vunpack.c.l.b16 %v52
    %v91 = vunpack.c.l.b16 %v53
    %v92 = vunpack.c.l.b16 %v54
    %v93 = vunpack.c.l.b16 %v55
    %v94 = vunpack.c.l.b16 %v56
    %v95 = vunpack.c.l.b16 %v57
    %v96 = vunpack.c.l.b16 %v58
    %v97 = vunpack.c.l.b16 %v59
    %v98 = vunpack.c.l.b16 %v60
    %v99 = vunpack.c.l.b16 %v61
    %v100 = vunpack.c.l.b16 %v62
    %v101 = vunpack.c.l.b16 %v63
    %v102 = vunpack.c.l.b16 %v64
    %v103 = vpack.c.b16 %v88, %v87
    %v104 = vpack.c.b16 %v90, %v89
    %v105 = vpack.c.b16 %v92, %v91
    %v106 = vpack.c.b16 %v94, %v93
    %v107 = vpack.c.b16 %v96, %v95
    %v108 = vpack.c.b16 %v98, %v97
    %v109 = vpack.c.b16 %v100, %v99
    %v110 = vpack.c.b16 %v102, %v101
    %119 = vmatpush.bf16.msra.mxu0 %v110
    %120 = vmatpush.bf16.msra.mxu0 %v109
    %121 = vmatpush.bf16.msra.mxu0 %v108
    %122 = vmatpush.bf16.msra.mxu0 %v107
    %123 = vmatpush.bf16.msra.mxu0 %v106
    %124 = vmatpush.bf16.msra.mxu0 %v105
    %125 = vmatpush.bf16.msra.mxu0 %v104
    %126 = vmatpush.bf16.msra.mxu0 %v103
    %127 = vmatmul.bf16.gmra.mxu0 %v69
    %v128 = vpop.f32.mrf.mxu0
    %v129 = vadd.f32 0.0, %v128
    %v130 = vpop.f32.mrf.mxu0
    %v131 = vadd.f32 0.0, %v130
    %132 = vdwg.mxu0
    %v133 = vmul.f32 %v129, 0.25
    %v134 = vmul.f32 %v131, 0.25
    %v135 = vld [vmem:[%s2] sm:$0x1]
    %v137 = vperm.slane %v135, 0
    %v139 = vadd.f32 %v133, %v137
    %v140 = vadd.f32 %v134, %v137
    %141 = vst [vmem:[#allocation7] sm:$0xff] %v139
    %142 = vst [vmem:[#allocation7 + $0x8] sm:$0xff] %v140
    // Predicated region
    $region22: #{tpu_custom_call.1} parent=1 // pred_check
      _
    $region23: #{tpu_custom_call.1} parent=1 // pred_check_branch
      %144 = sbr.rel (0) target = $region25
    $region24: #{tpu_custom_call.1} parent=1 // pred_region
      %146 = vsyncadd [#allocation4], 0
      %s147 = sshll.u32 [#allocation7], 4
      %s148 = int_to_ptr.vmem [resolvable:$true] %s147
      %s149 = sshll.u32 %s3, 4
      %s150 = int_to_ptr.hbm [resolvable:$true] %s149
      %155 = dma.vmem_to_hbm [thread:$0]  %s148, 256, %s150, [#allocation4], 128, 128, 8
    $region25: #{tpu_custom_call.1} parent=1 // pred_fallthru
      _
    // Predicated region
    $region26: #{tpu_custom_call.1} parent=1 // pred_check
      _
    $region27: #{tpu_custom_call.1} parent=1 // pred_check_branch
      %157 = sbr.rel (0) target = $region29
    $region28: #{tpu_custom_call.1} parent=1 // pred_region
      %159 = dma.done [#allocation4], 256
    $region29: #{tpu_custom_call.1} parent=1 // pred_fallthru
      _
    %160 = vsyncpa [#allocation3], 1
    %161 = vsyncpa [#allocation6], 1
    %162 = vsyncpa [#allocation4], 1

</llo_original>
